<compile_context>
chip_gen: v5e
topology: v5e:2x2
jax: 0.10.0
libtpu: 0.0.40
codegen_flags: <defaults>
</compile_context>

<pallas_src>
import jax
import jax.numpy as jnp
from jax.experimental import pallas as pl
from jax.experimental.pallas import tpu as pltpu


def scorenet_kernel(z_ref, w1_ref, b1_ref, w2_ref, b2_ref, out_ref):
    # Hidden layer: h = relu(z @ W1 + b1).  bf16 MXU operands, f32 accumulation.
    zb = z_ref[...].astype(jnp.bfloat16)                                 # (M, D)
    h = jnp.dot(zb, w1_ref[...], preferred_element_type=jnp.float32)     # (M, H) f32
    h = jnp.maximum(h + b1_ref[...], 0.0)                                # f32 VPU epilogue
    # Output layer: out = h @ W2 + b2.  Cast h to bf16 only for the MXU operand.
    # TODO(synk): keep h in f32 for this matmul if full-f32 fidelity is required.
    o = jnp.dot(h.astype(jnp.bfloat16), w2_ref[...],
                preferred_element_type=jnp.float32)                      # (M, D) f32
    out_ref[...] = (o + b2_ref[...]).astype(out_ref.dtype)


def scorenet_forward(z, w1, b1, w2, b2, *, batch_tile=256):
    """z: (B, latent) f32.  w1: (latent, hidden) bf16, b1: (1, hidden) f32,
    w2: (hidden, latent) bf16, b2: (1, latent) f32.  Returns (B, latent) f32."""
    B, D = z.shape
    H = w1.shape[1]
    out_shape = jax.ShapeDtypeStruct((B, D), jnp.float32)

    bytes_accessed = (z.size * 4 + w1.size * 2 + b1.size * 4
                      + w2.size * 2 + b2.size * 4 + B * D * 4)
    cost = pl.CostEstimate(flops=2 * B * (D * H + H * D),
                           transcendentals=0,
                           bytes_accessed=bytes_accessed)

    if B % batch_tile == 0 and B > batch_tile:
        # Batch-tiled grid path: weights stay VMEM-resident via constant
        # index_maps; "parallel" shards grid steps across v7x's two TCs.
        return pl.pallas_call(
            scorenet_kernel,
            out_shape=out_shape,
            grid=(B // batch_tile,),
            in_specs=[
                pl.BlockSpec((batch_tile, D), lambda i: (i, 0)),
                pl.BlockSpec(w1.shape, lambda i: (0, 0)),
                pl.BlockSpec(b1.shape, lambda i: (0, 0)),
                pl.BlockSpec(w2.shape, lambda i: (0, 0)),
                pl.BlockSpec(b2.shape, lambda i: (0, 0)),
            ],
            out_specs=pl.BlockSpec((batch_tile, D), lambda i: (i, 0)),
            compiler_params=pltpu.CompilerParams(
                dimension_semantics=("parallel",)),
            cost_estimate=cost,
        )(z, w1, b1, w2, b2)

    # Small batch: single grid-less call, whole-array VMEM blocks, no padding,
    # no software-pipeline prologue/epilogue.
    return pl.pallas_call(
        scorenet_kernel,
        out_shape=out_shape,
        in_specs=[pl.BlockSpec(memory_space=pltpu.MemorySpace.VMEM)] * 5,
        out_specs=pl.BlockSpec(memory_space=pltpu.MemorySpace.VMEM),
        cost_estimate=cost,
    )(z, w1, b1, w2, b2)


def init_scorenet_params(key, latent_dim, hidden_dim):
    """PyTorch-style nn.Linear init.  Returns (f32 reference params,
    kernel params at dtype-minimum shapes: bf16 weights, f32 (1, n) biases)."""
    k1, k2, k3, k4 = jax.random.split(key, 4)
    bound1 = 1.0 / jnp.sqrt(latent_dim)
    bound2 = 1.0 / jnp.sqrt(hidden_dim)
    # Stored as (in_features, out_features) so the kernel computes x @ W.
    w1 = jax.random.uniform(k1, (latent_dim, hidden_dim), jnp.float32, -bound1, bound1)
    b1 = jax.random.uniform(k2, (hidden_dim,), jnp.float32, -bound1, bound1)
    w2 = jax.random.uniform(k3, (hidden_dim, latent_dim), jnp.float32, -bound2, bound2)
    b2 = jax.random.uniform(k4, (latent_dim,), jnp.float32, -bound2, bound2)

    kernel_params = (w1.astype(jnp.bfloat16), b1.reshape(1, -1),
                     w2.astype(jnp.bfloat16), b2.reshape(1, -1))
    return (w1, b1, w2, b2), kernel_params


if __name__ == "__main__":
    batch = 8
    latent_dim = 16
    hidden_dim = 32

    key = jax.random.PRNGKey(0)
    kz, kparam = jax.random.split(key)
    z = jax.random.normal(kz, (batch, latent_dim), dtype=jnp.float32)
    (w1, b1, w2, b2), kernel_params = init_scorenet_params(kparam, latent_dim, hidden_dim)

    # Pure-JAX reference using the same bf16-rounded MXU operands / f32 accumulation.
    def ref_fn(zz):
        zb = zz.astype(jnp.bfloat16).astype(jnp.float32)
        w1b = w1.astype(jnp.bfloat16).astype(jnp.float32)
        w2b = w2.astype(jnp.bfloat16).astype(jnp.float32)
        h = jnp.maximum(zb @ w1b + b1, 0.0)
        return h.astype(jnp.bfloat16).astype(jnp.float32) @ w2b + b2

    # Small-batch (grid-less) path.
    out = jax.block_until_ready(scorenet_forward(z, *kernel_params))
    assert out.shape == (batch, latent_dim)
    assert jnp.allclose(out, ref_fn(z), atol=5e-3, rtol=5e-3)

    # Exercise the batch-tiled grid path once (B=512, tile=256) to cover scaling.
    z_big = jax.random.normal(jax.random.PRNGKey(1), (512, latent_dim), jnp.float32)
    out_big = jax.block_until_ready(scorenet_forward(z_big, *kernel_params))
    assert jnp.allclose(out_big, ref_fn(z_big), atol=5e-3, rtol=5e-3)

    print("KERNEL_OK")
</pallas_src>

<mosaic_0001>
module attributes {stable_mosaic.version = 11 : i64} {
  func.func @scorenet_kernel(%arg0: memref<8x16xf32, #tpu.memory_space<vmem>>, %arg1: memref<16x32xbf16, #tpu.memory_space<vmem>>, %arg2: memref<1x32xf32, #tpu.memory_space<vmem>>, %arg3: memref<32x16xbf16, #tpu.memory_space<vmem>>, %arg4: memref<1x16xf32, #tpu.memory_space<vmem>>, %arg5: memref<8x16xf32, #tpu.memory_space<vmem>>) attributes {dimension_semantics = [], scalar_prefetch = 0 : i64, scratch_operands = 0 : i64, tpu.core_type = #tpu.core_type<tc>} {
    %c0 = arith.constant 0 : index
    %c0_0 = arith.constant 0 : index
    %0 = vector.load %arg0[%c0, %c0_0] : memref<8x16xf32, #tpu.memory_space<vmem>>, vector<8x16xf32>
    %1 = arith.truncf %0 : vector<8x16xf32> to vector<8x16xbf16>
    %c0_1 = arith.constant 0 : index
    %c0_2 = arith.constant 0 : index
    %2 = vector.load %arg1[%c0_1, %c0_2] : memref<16x32xbf16, #tpu.memory_space<vmem>>, vector<16x32xbf16>
    %cst = arith.constant dense<0.000000e+00> : vector<8x32xf32>
    %3 = tpu.matmul %1, %2, %cst {dimension_numbers = #tpu.dot_dimension_numbers<[1], [0], [0], [1], [0, 0, 1, 1], [], []>} : vector<8x16xbf16>, vector<16x32xbf16>, vector<8x32xf32> -> vector<8x32xf32>
    %c0_3 = arith.constant 0 : index
    %c0_4 = arith.constant 0 : index
    %4 = vector.load %arg2[%c0_3, %c0_4] : memref<1x32xf32, #tpu.memory_space<vmem>>, vector<1x32xf32>
    %5 = vector.broadcast %4 : vector<1x32xf32> to vector<8x32xf32>
    %6 = arith.addf %3, %5 : vector<8x32xf32>
    %cst_5 = arith.constant 0.000000e+00 : f32
    %7 = vector.broadcast %cst_5 : f32 to vector<8x32xf32>
    %8 = arith.maximumf %6, %7 : vector<8x32xf32>
    %9 = arith.truncf %8 : vector<8x32xf32> to vector<8x32xbf16>
    %c0_6 = arith.constant 0 : index
    %c0_7 = arith.constant 0 : index
    %10 = vector.load %arg3[%c0_6, %c0_7] : memref<32x16xbf16, #tpu.memory_space<vmem>>, vector<32x16xbf16>
    %cst_8 = arith.constant dense<0.000000e+00> : vector<8x16xf32>
    %11 = tpu.matmul %9, %10, %cst_8 {dimension_numbers = #tpu.dot_dimension_numbers<[1], [0], [0], [1], [0, 0, 1, 1], [], []>} : vector<8x32xbf16>, vector<32x16xbf16>, vector<8x16xf32> -> vector<8x16xf32>
    %c0_9 = arith.constant 0 : index
    %c0_10 = arith.constant 0 : index
    %12 = vector.load %arg4[%c0_9, %c0_10] : memref<1x16xf32, #tpu.memory_space<vmem>>, vector<1x16xf32>
    %13 = vector.broadcast %12 : vector<1x16xf32> to vector<8x16xf32>
    %14 = arith.addf %11, %13 : vector<8x16xf32>
    %c0_11 = arith.constant 0 : index
    %c0_12 = arith.constant 0 : index
    %15 = vector.load %arg5[%c0_11, %c0_12] : memref<8x16xf32, #tpu.memory_space<vmem>>, vector<8x16xf32>
    tpu.vector_store %arg5[%c0_11, %c0_12], %14 {strides = array<i32>} : memref<8x16xf32, #tpu.memory_space<vmem>>, vector<8x16xf32>,
    return
  }
}

</mosaic_0001>

<llo_original>
// kernel: tpu_custom_call.1
$region0: #{tpu_custom_call.1}
  #allocation0 [shape = 'u32[]', space=smem, size = 0x4, offset = 0x4, fixed_abs, tag = 'smem constant byte address 0x4 - core index']
  #allocation1 [shape = 'u32[72,128]{1,0:T(1,128)}', space=vmem, size = 0x9000, scoped, tag = 'internal scratch']
  %s0 = inlined_call_operand.vmem [shape: f32[8,16], index: 0, kind: input, shape index: {}]
  %s1 = inlined_call_operand.vmem [shape: bf16[16,32], index: 1, kind: input, shape index: {}]
  %s2 = inlined_call_operand.vmem [shape: f32[1,32], index: 2, kind: input, shape index: {}]
  %s3 = inlined_call_operand.vmem [shape: bf16[32,16], index: 3, kind: input, shape index: {}]
  %s4 = inlined_call_operand.vmem [shape: f32[1,16], index: 4, kind: input, shape index: {}]
  %s5 = inlined_call_operand.hbm [shape: f32[8,16], index: 5, kind: output, shape index: {}]
  %s6 = sld [smem:[#allocation0]]
  $region30: #{tpu_custom_call.1} parent=0
    _
  %s8 = ssub.s32 1, %s6
  %s9 = scalar_select 0, %s8, %s6
  $region1: #{tpu_custom_call.1} parent=0
    #allocation2 [shape = 'u8[4096]{0}', space=vmem, size = 0x1000, scoped, tag = 'output window, operand 0, single buffered']
    #allocation3 [shape = 's32[1]{0}', space=sflag, size = 0x4, scoped, tag = 'scoped memory for tpu_custom_call.1']
    %10 = vsyncpa [#allocation3], 0
    // Predicated region
    $region2: #{tpu_custom_call.1} parent=1 // pred_check
      _
    $region3: #{tpu_custom_call.1} parent=1 // pred_check_branch
      %12 = sbr.rel (0) target = $region5
    $region4: #{tpu_custom_call.1} parent=1 // pred_region
      _
    $region5: #{tpu_custom_call.1} parent=1 // pred_fallthru
      _
    // Predicated region
    $region6: #{tpu_custom_call.1} parent=1 // pred_check
      _
    $region7: #{tpu_custom_call.1} parent=1 // pred_check_branch
      %14 = sbr.rel (0) target = $region9
    $region8: #{tpu_custom_call.1} parent=1 // pred_region
      _
    $region9: #{tpu_custom_call.1} parent=1 // pred_fallthru
      _
    // Predicated region
    $region10: #{tpu_custom_call.1} parent=1 // pred_check
      _
    $region11: #{tpu_custom_call.1} parent=1 // pred_check_branch
      %16 = sbr.rel (0) target = $region13
    $region12: #{tpu_custom_call.1} parent=1 // pred_region
      _
    $region13: #{tpu_custom_call.1} parent=1 // pred_fallthru
      _
    // Predicated region
    $region14: #{tpu_custom_call.1} parent=1 // pred_check
      _
    $region15: #{tpu_custom_call.1} parent=1 // pred_check_branch
      %18 = sbr.rel (0) target = $region17
    $region16: #{tpu_custom_call.1} parent=1 // pred_region
      _
    $region17: #{tpu_custom_call.1} parent=1 // pred_fallthru
      _
    // Predicated region
    $region18: #{tpu_custom_call.1} parent=1 // pred_check
      _
    $region19: #{tpu_custom_call.1} parent=1 // pred_check_branch
      %20 = sbr.rel (0) target = $region21
    $region20: #{tpu_custom_call.1} parent=1 // pred_region
      _
    $region21: #{tpu_custom_call.1} parent=1 // pred_fallthru
      _
    %v22 = vld [vmem:[%s0] sm:$0xff]
    %v23 = vpack.c.bf16 %v22, %v22
    %v24 = vld [vmem:[%s1] sm:$0xf]
    %v25 = vld [vmem:[%s1 + $0x4] sm:$0xf]
    %v26 = vld [vmem:[%s2] sm:$0x1]
    %v28 = vperm.slane %v26, 0
    %v32 = vunpack.c.l.b16 %v24
    %v33 = vunpack.c.l.b16 %v25
    %v34 = vpack.c.b16 %v33, %v32
    %vm36 = vcmask 130048
    %v38 = vsel %vm36, %v23, 0
    %40 = vmatpush.bf16.msra.mxu0 0
    %41 = vmatpush.bf16.msra.mxu0 0
    %42 = vmatpush.bf16.msra.mxu0 0
    %43 = vmatpush.bf16.msra.mxu0 0
    %44 = vmatpush.bf16.msra.mxu0 0
    %45 = vmatpush.bf16.msra.mxu0 0
    %46 = vmatpush.bf16.msra.mxu0 0
    %47 = vmatpush.bf16.msra.mxu0 %v34
    %48 = vmatmul.bf16.gmra.mxu0 %v38
    %v49 = vpop.f32.mrf.mxu0
    %v50 = vadd.f32 %v28, %v49
    %v51 = vpop.f32.mrf.mxu0
    %52 = vdwg.mxu0
    %v53 = vmax.f32 %v50, 0.0
    %v54 = vpack.c.bf16 %v53, %v53
    %v55 = vld [vmem:[%s3] sm:$0xf]
    %v56 = vld [vmem:[%s3 + $0x4] sm:$0xf]
    %v57 = vld [vmem:[%s3 + $0x8] sm:$0xf]
    %v58 = vld [vmem:[%s3 + $0xc] sm:$0xf]
    %v59 = vld [vmem:[%s4] sm:$0x1]
    %v61 = vperm.slane %v59, 0
    %v67 = vunpack.c.l.b16 %v55
    %v68 = vunpack.c.l.b16 %v56
    %v69 = vunpack.c.l.b16 %v57
    %v70 = vunpack.c.l.b16 %v58
    %v71 = vpack.c.b16 %v68, %v67
    %v72 = vpack.c.b16 %v70, %v69
    %vm75 = vcmask 261120
    %v77 = vsel %vm75, %v54, 0
    %79 = vmatpush.bf16.msra.mxu0 0
    %80 = vmatpush.bf16.msra.mxu0 0
    %81 = vmatpush.bf16.msra.mxu0 0
    %82 = vmatpush.bf16.msra.mxu0 0
    %83 = vmatpush.bf16.msra.mxu0 0
    %84 = vmatpush.bf16.msra.mxu0 0
    %85 = vmatpush.bf16.msra.mxu0 %v72
    %86 = vmatpush.bf16.msra.mxu0 %v71
    %87 = vmatmul.bf16.gmra.mxu0 %v77
    %v88 = vpop.f32.mrf.mxu0
    %v89 = vadd.f32 %v61, %v88
    %v90 = vpop.f32.mrf.mxu0
    %91 = vdwg.mxu0
    %92 = vst.msk [vmem:[#allocation2] sm:$0xff] %vm36, %v89
    // Predicated region
    $region22: #{tpu_custom_call.1} parent=1 // pred_check
      _
    $region23: #{tpu_custom_call.1} parent=1 // pred_check_branch
      %94 = sbr.rel (0) target = $region25
    $region24: #{tpu_custom_call.1} parent=1 // pred_region
      %96 = vsyncadd [#allocation3], 0
      %s98 = sshll.u32 [#allocation2], 4
      %s99 = int_to_ptr.vmem [resolvable:$true] %s98
      %s100 = sshll.u32 %s5, 4
      %s101 = int_to_ptr.hbm [resolvable:$true] %s100
      %103 = dma.vmem_to_hbm [thread:$0]  %s99, 128, %s101, [#allocation3]
    $region25: #{tpu_custom_call.1} parent=1 // pred_fallthru
      _
    // Predicated region
    $region26: #{tpu_custom_call.1} parent=1 // pred_check
      _
    $region27: #{tpu_custom_call.1} parent=1 // pred_check_branch
      %105 = sbr.rel (0) target = $region29
    $region28: #{tpu_custom_call.1} parent=1 // pred_region
      %107 = dma.done [#allocation3], 128
    $region29: #{tpu_custom_call.1} parent=1 // pred_fallthru
      _
    %108 = vsyncpa [#allocation3], 1

</llo_original>
